<compile_context>
chip_gen: v5e
topology: v5e:2x2
jax: 0.10.0
libtpu: 0.0.40
codegen_flags: <defaults>
</compile_context>

<pallas_src>
import jax
import jax.numpy as jnp
from jax.experimental import pallas as pl
from jax.experimental.pallas import tpu as pltpu


# ----------------------------------------------------------------------------
# Pallas kernel: row-tiled projection with fused epilogue
#     y = tanh(x @ W + b) * keep
#   x tile:    (tm, H) bf16      W: (H, H) bf16 (resident)
#   b:         (1, H)  f32 (resident)
#   keep tile: (tm, 1) f32 (0.0 reproduces torch's untouched zero-padded slot)
#   y tile:    (tm, H) f32
# ----------------------------------------------------------------------------
def encoder_kernel(x_ref, w_ref, b_ref, keep_ref, o_ref):
    acc = jnp.dot(x_ref[...], w_ref[...], preferred_element_type=jnp.float32)
    y = jnp.tanh(acc + b_ref[...])          # Dropout(p=0.33): eval -> identity
    o_ref[...] = (y * keep_ref[...]).astype(o_ref.dtype)


def encoder_project(x, w, b, keep, tm=1024):
    """y = tanh(x @ w + b) * keep.   x: (M, H) f32 -> (M, H) f32."""
    M, H = x.shape

    # Keep the "parallel" row axis >= 2 steps (256-aligned) when M allows it so
    # v7x's two TensorCores both get work; tm=1024 default amortizes the
    # ~0.35us/step pipeline overhead on v5e/v6e and stays inside their
    # scoped-VMEM defaults at BERT-scale H.
    if M >= 512:
        tm = min(tm, max(256, ((M // 2) // 256) * 256))
    tm = min(tm, M)

    # No pad / out[:M] slice: ragged last block is handled by Pallas (OOB reads
    # feed row-independent, bounded math; OOB writes are masked).
    grid = (pl.cdiv(M, tm),)

    x_bf = x.astype(jnp.bfloat16)
    w_bf = w.astype(jnp.bfloat16)
    keep = keep.astype(jnp.float32)

    return pl.pallas_call(
        encoder_kernel,
        out_shape=jax.ShapeDtypeStruct((M, H), jnp.float32),
        grid=grid,
        in_specs=[
            pl.BlockSpec((tm, H), lambda i: (i, 0)),   # x row tile
            pl.BlockSpec((H, H), lambda i: (0, 0)),    # W resident
            pl.BlockSpec((1, H), lambda i: (0, 0)),    # b resident
            pl.BlockSpec((tm, 1), lambda i: (i, 0)),   # keep (zero-slot) flags
        ],
        out_specs=pl.BlockSpec((tm, H), lambda i: (i, 0)),
        compiler_params=pltpu.CompilerParams(
            dimension_semantics=("parallel",)),
    )(x_bf, w_bf, b, keep)


# ----------------------------------------------------------------------------
# Forward: embeddings + index glue in JAX, projection hot path in Pallas.
# ----------------------------------------------------------------------------
def text_plugin_forward(params, input_ids, attention_mask, valid_ids,
                        adj_matrix, text_aspect_index):
    del adj_matrix  # gcn_layer_number == 0 -> GCN branch unused
    B, L = input_ids.shape

    # Synthetic stand-in encoder embeddings (gather glue).
    tok = params["tok_emb"][input_ids]                          # (B, L, H)
    pos = params["pos_emb"][None, :L, :]                        # (1, L, H)
    x = (tok + pos) * attention_mask[..., None].astype(jnp.float32)

    # TextPlugin compaction + aspect pick collapses to one source row per batch
    # element: row src[i] is the (text_aspect_index[i]+1)-th position with
    # valid_ids == 1; has_valid[i] == 0 means torch would read an untouched
    # (zero) slot of valid_output.
    valid = valid_ids.astype(jnp.int32)
    dest = jnp.cumsum(valid, axis=1) - 1                        # dest slot per src
    match = (valid == 1) & (dest == text_aspect_index[:, None])
    has_valid = jnp.any(match, axis=1)                          # (B,)
    src = jnp.argmax(match, axis=1)                             # (B,)

    # Project only the B selected rows (stand-in encoder is per-row, so this is
    # exact).  The tiny B-row gather is a plain XLA op and fuses under jit.
    x_sel = x[jnp.arange(B), src]                               # (B, H)
    keep = has_valid.astype(jnp.float32)[:, None]               # (B, 1)

    return encoder_project(x_sel, params["w"], params["b"], keep)   # (B, H)


# ----------------------------------------------------------------------------
# Pure-JAX reference mirroring the torch loops (same bf16-MXU-input / f32-accum
# policy as the kernel so the comparison is tight).
# ----------------------------------------------------------------------------
def reference_forward(params, input_ids, attention_mask, valid_ids,
                      adj_matrix, text_aspect_index):
    del adj_matrix
    B, L = input_ids.shape
    H = params["w"].shape[0]
    tok = params["tok_emb"][input_ids]
    pos = params["pos_emb"][None, :L, :]
    x = (tok + pos) * attention_mask[..., None].astype(jnp.float32)
    xb = x.reshape(B * L, H).astype(jnp.bfloat16)
    wb = params["w"].astype(jnp.bfloat16)
    seq = jnp.tanh(jnp.dot(xb, wb, preferred_element_type=jnp.float32)
                   + params["b"]).reshape(B, L, H)               # f32

    valid_output = jnp.zeros_like(seq)
    for i in range(B):
        idxs = [j for j in range(L) if int(valid_ids[i, j]) == 1]
        for dst, s in enumerate(idxs):
            valid_output = valid_output.at[i, dst].set(seq[i, s])
    rows = [valid_output[i, int(text_aspect_index[i])] for i in range(B)]
    return jnp.stack(rows)


if __name__ == "__main__":
    B, L, H, VOCAB = 3, 8, 32, 50

    key = jax.random.PRNGKey(0)
    k_tok, k_pos, k_w, k_b, k_ids = jax.random.split(key, 5)

    params = {
        "tok_emb": jax.random.normal(k_tok, (VOCAB, H), jnp.float32) * 0.1,
        "pos_emb": jax.random.normal(k_pos, (L, H), jnp.float32) * 0.1,
        "w": jax.random.normal(k_w, (H, H), jnp.float32) * 0.1,
        "b": jax.random.normal(k_b, (1, H), jnp.float32) * 0.1,
    }

    input_ids = jax.random.randint(k_ids, (B, L), 0, VOCAB, dtype=jnp.int32)
    attention_mask = jnp.ones((B, L), dtype=jnp.int32)
    valid_ids = jnp.array([[1, 0, 1, 1, 0, 1, 1, 0],
                           [1, 1, 1, 0, 0, 1, 0, 1],
                           [0, 1, 0, 1, 1, 0, 0, 0]], dtype=jnp.int32)
    adj_matrix = jnp.eye(L, dtype=jnp.float32)[None].repeat(B, axis=0)
    # Batch 2's aspect index (6) exceeds its number of valid tokens (3) ->
    # exercises the zero-row (padded compaction slot) path.
    text_aspect_index = jnp.array([2, 3, 6], dtype=jnp.int32)

    fwd = jax.jit(text_plugin_forward)
    out = fwd(params, input_ids, attention_mask, valid_ids,
              adj_matrix, text_aspect_index)
    out = jax.block_until_ready(out)

    ref = reference_forward(params, input_ids, attention_mask, valid_ids,
                            adj_matrix, text_aspect_index)
    assert out.shape == (B, H), out.shape
    assert jnp.allclose(out, ref, atol=1e-3, rtol=1e-3), "mismatch vs reference"
    assert jnp.allclose(out[2], 0.0), "out-of-range aspect should yield zeros"

    print("KERNEL_OK")
</pallas_src>

<mosaic_0001>
module attributes {stable_mosaic.version = 11 : i64} {
  func.func @encoder_kernel(%arg0: i32, %arg1: memref<3x32xbf16, #tpu.memory_space<vmem>>, %arg2: memref<32x32xbf16, #tpu.memory_space<vmem>>, %arg3: memref<1x32xf32, #tpu.memory_space<vmem>>, %arg4: memref<3x1xf32, #tpu.memory_space<vmem>>, %arg5: memref<3x32xf32, #tpu.memory_space<vmem>>) attributes {dimension_semantics = [#tpu.dimension_semantics<parallel>], iteration_bounds = array<i64: 1>, scalar_prefetch = 0 : i64, scratch_operands = 0 : i64, tpu.core_type = #tpu.core_type<tc>, window_params = [{transform_indices = @transform_0, window_bounds = array<i64: 3, 32>}, {pipeline_mode = #tpu.pipeline_mode<synchronous>, transform_indices = @transform_1, window_bounds = array<i64: 32, 32>}, {pipeline_mode = #tpu.pipeline_mode<synchronous>, transform_indices = @transform_2, window_bounds = array<i64: 1, 32>}, {transform_indices = @transform_3, window_bounds = array<i64: 3, 1>}, {transform_indices = @transform_4, window_bounds = array<i64: 3, 32>}]} {
    %c0 = arith.constant 0 : index
    %c0_0 = arith.constant 0 : index
    %0 = vector.load %arg1[%c0, %c0_0] : memref<3x32xbf16, #tpu.memory_space<vmem>>, vector<3x32xbf16>
    %c0_1 = arith.constant 0 : index
    %c0_2 = arith.constant 0 : index
    %1 = vector.load %arg2[%c0_1, %c0_2] : memref<32x32xbf16, #tpu.memory_space<vmem>>, vector<32x32xbf16>
    %cst = arith.constant dense<0.000000e+00> : vector<3x32xf32>
    %2 = tpu.matmul %0, %1, %cst {dimension_numbers = #tpu.dot_dimension_numbers<[1], [0], [0], [1], [0, 0, 1, 1], [], []>} : vector<3x32xbf16>, vector<32x32xbf16>, vector<3x32xf32> -> vector<3x32xf32>
    %c0_3 = arith.constant 0 : index
    %c0_4 = arith.constant 0 : index
    %3 = vector.load %arg3[%c0_3, %c0_4] : memref<1x32xf32, #tpu.memory_space<vmem>>, vector<1x32xf32>
    %4 = vector.broadcast %3 : vector<1x32xf32> to vector<3x32xf32>
    %5 = arith.addf %2, %4 : vector<3x32xf32>
    %6 = math.tanh %5 : vector<3x32xf32>
    %c0_5 = arith.constant 0 : index
    %c0_6 = arith.constant 0 : index
    %7 = vector.load %arg4[%c0_5, %c0_6] : memref<3x1xf32, #tpu.memory_space<vmem>>, vector<3x1xf32>
    %8 = vector.broadcast %7 : vector<3x1xf32> to vector<3x32xf32>
    %9 = arith.mulf %6, %8 : vector<3x32xf32>
    %c0_7 = arith.constant 0 : index
    %c0_8 = arith.constant 0 : index
    %10 = vector.load %arg5[%c0_7, %c0_8] : memref<3x32xf32, #tpu.memory_space<vmem>>, vector<3x32xf32>
    tpu.vector_store %arg5[%c0_7, %c0_8], %9 {strides = array<i32>} : memref<3x32xf32, #tpu.memory_space<vmem>>, vector<3x32xf32>,
    return
  }
  func.func @transform_0(%arg0: i32) -> (i32, i32) {
    %c0_i32 = arith.constant 0 : i32
    %c0_i32_0 = arith.constant 0 : i32
    return %arg0, %c0_i32 : i32, i32
  }
  func.func @transform_1(%arg0: i32) -> (i32, i32) {
    %c0_i32 = arith.constant 0 : i32
    %c0_i32_0 = arith.constant 0 : i32
    %c0_i32_1 = arith.constant 0 : i32
    return %c0_i32, %c0_i32_0 : i32, i32
  }
  func.func @transform_2(%arg0: i32) -> (i32, i32) {
    %c0_i32 = arith.constant 0 : i32
    %c0_i32_0 = arith.constant 0 : i32
    %c0_i32_1 = arith.constant 0 : i32
    return %c0_i32, %c0_i32_0 : i32, i32
  }
  func.func @transform_3(%arg0: i32) -> (i32, i32) {
    %c0_i32 = arith.constant 0 : i32
    %c0_i32_0 = arith.constant 0 : i32
    return %arg0, %c0_i32 : i32, i32
  }
  func.func @transform_4(%arg0: i32) -> (i32, i32) {
    %c0_i32 = arith.constant 0 : i32
    %c0_i32_0 = arith.constant 0 : i32
    return %arg0, %c0_i32 : i32, i32
  }
}

</mosaic_0001>

<llo_original>
// kernel: text_plugin_forward.1
$region0: #{text_plugin_forward.1}
  #allocation0 [shape = 'u32[]', space=smem, size = 0x4, offset = 0x4, fixed_abs, tag = 'smem constant byte address 0x4 - core index']
  #allocation1 [shape = 'u32[72,128]{1,0:T(1,128)}', space=vmem, size = 0x9000, scoped, tag = 'internal scratch']
  %s0 = inlined_call_operand.vmem [shape: bf16[3,32], index: 0, kind: input, shape index: {}]
  %s1 = inlined_call_operand.vmem [shape: bf16[32,32], index: 1, kind: input, shape index: {}]
  %s2 = inlined_call_operand.vmem [shape: f32[1,32], index: 2, kind: input, shape index: {}]
  %s3 = inlined_call_operand.vmem [shape: f32[3,1], index: 3, kind: input, shape index: {}]
  %s4 = inlined_call_operand.hbm [shape: f32[3,32], index: 4, kind: output, shape index: {}]
  %s5 = sld [smem:[#allocation0]]
  $region26: #{text_plugin_forward.1} parent=0
    _
  %s7 = ssub.s32 1, %s5
  %s8 = scalar_select 0, %s7, %s5
  $region1: #{text_plugin_forward.1} parent=0
    #allocation2 [shape = 'u8[2048]{0}', space=vmem, size = 0x800, scoped, tag = 'output window, operand 0, single buffered']
    #allocation3 [shape = 's32[1]{0}', space=sflag, size = 0x4, scoped, tag = 'scoped memory for text_plugin_forward.1']
    %9 = vsyncpa [#allocation3], 0
    // Predicated region
    $region2: #{text_plugin_forward.1} parent=1 // pred_check
      _
    $region3: #{text_plugin_forward.1} parent=1 // pred_check_branch
      %11 = sbr.rel (0) target = $region5
    $region4: #{text_plugin_forward.1} parent=1 // pred_region
      _
    $region5: #{text_plugin_forward.1} parent=1 // pred_fallthru
      _
    // Predicated region
    $region6: #{text_plugin_forward.1} parent=1 // pred_check
      _
    $region7: #{text_plugin_forward.1} parent=1 // pred_check_branch
      %13 = sbr.rel (0) target = $region9
    $region8: #{text_plugin_forward.1} parent=1 // pred_region
      _
    $region9: #{text_plugin_forward.1} parent=1 // pred_fallthru
      _
    // Predicated region
    $region10: #{text_plugin_forward.1} parent=1 // pred_check
      _
    $region11: #{text_plugin_forward.1} parent=1 // pred_check_branch
      %15 = sbr.rel (0) target = $region13
    $region12: #{text_plugin_forward.1} parent=1 // pred_region
      _
    $region13: #{text_plugin_forward.1} parent=1 // pred_fallthru
      _
    // Predicated region
    $region14: #{text_plugin_forward.1} parent=1 // pred_check
      _
    $region15: #{text_plugin_forward.1} parent=1 // pred_check_branch
      %17 = sbr.rel (0) target = $region17
    $region16: #{text_plugin_forward.1} parent=1 // pred_region
      _
    $region17: #{text_plugin_forward.1} parent=1 // pred_fallthru
      _
    %v19 = vld [vmem:[%s0] sm:$0x3]
    %v20 = vld [vmem:[%s1] sm:$0xf]
    %v21 = vld [vmem:[%s1 + $0x4] sm:$0xf]
    %v22 = vld [vmem:[%s1 + $0x8] sm:$0xf]
    %v23 = vld [vmem:[%s1 + $0xc] sm:$0xf]
    %v24 = vld [vmem:[%s2] sm:$0x1]
    %v26 = vperm.slane %v24, 0
    %v32 = vunpack.c.l.b16 %v20
    %v33 = vunpack.c.l.b16 %v21
    %v34 = vunpack.c.l.b16 %v22
    %v35 = vunpack.c.l.b16 %v23
    %v36 = vpack.c.b16 %v33, %v32
    %v37 = vpack.c.b16 %v35, %v34
    %vm40 = vcmask 261120
    %v42 = vsel %vm40, %v19, 0
    %44 = vmatpush.bf16.msra.mxu0 0
    %45 = vmatpush.bf16.msra.mxu0 0
    %46 = vmatpush.bf16.msra.mxu0 0
    %47 = vmatpush.bf16.msra.mxu0 0
    %48 = vmatpush.bf16.msra.mxu0 0
    %49 = vmatpush.bf16.msra.mxu0 0
    %50 = vmatpush.bf16.msra.mxu0 %v37
    %51 = vmatpush.bf16.msra.mxu0 %v36
    %52 = vmatmul.bf16.gmra.mxu0 %v42
    %v53 = vpop.f32.mrf.mxu0
    %v54 = vadd.f32 %v26, %v53
    %v55 = vpop.f32.mrf.mxu0
    %56 = vdwg.mxu0
    %v57 = vtanh.pop %v54
    %v58 = vld [vmem:[%s3] sm:$0x7]
    %60 = vset.pattern.permute.xlu0 0
    %61 = vperm.xlu0 %60, %v58
    %v62 = vpop.permute.xlu0 %61
    %v64 = vmul.f32 %v57, %v62
    %vm65 = vcmask 256000
    %66 = vst.msk [vmem:[#allocation2] sm:$0x7] %vm65, %v64
    // Predicated region
    $region18: #{text_plugin_forward.1} parent=1 // pred_check
      _
    $region19: #{text_plugin_forward.1} parent=1 // pred_check_branch
      %68 = sbr.rel (0) target = $region21
    $region20: #{text_plugin_forward.1} parent=1 // pred_region
      %70 = vsyncadd [#allocation3], 0
      %s72 = sshll.u32 [#allocation2], 4
      %s73 = int_to_ptr.vmem [resolvable:$true] %s72
      %s74 = sshll.u32 %s4, 4
      %s75 = int_to_ptr.hbm [resolvable:$true] %s74
      %77 = dma.vmem_to_hbm [thread:$0]  %s73, 64, %s75, [#allocation3]
    $region21: #{text_plugin_forward.1} parent=1 // pred_fallthru
      _
    // Predicated region
    $region22: #{text_plugin_forward.1} parent=1 // pred_check
      _
    $region23: #{text_plugin_forward.1} parent=1 // pred_check_branch
      %79 = sbr.rel (0) target = $region25
    $region24: #{text_plugin_forward.1} parent=1 // pred_region
      %81 = dma.done [#allocation3], 64
    $region25: #{text_plugin_forward.1} parent=1 // pred_fallthru
      _
    %82 = vsyncpa [#allocation3], 1

</llo_original>
